<compile_context>
chip_gen: v6e
topology: v6e:2x2x1
jax: 0.10.0
libtpu: 0.0.40
codegen_flags: <defaults>
</compile_context>

<pallas_src>
import jax
import jax.numpy as jnp
from jax.experimental import pallas as pl
from jax.experimental.pallas import tpu as pltpu

_LANES = 128
_MiB = 1024 * 1024


def _round_up(a, b):
    return ((a + b - 1) // b) * b


def _vmem_budget_bytes():
    """Generation-aware scoped-VMEM budget.

    v5e/v6e (128 MiB physical) -> 64 MiB; v7x (64 MiB physical) -> 48 MiB.
    Falls back to the v7x-safe 48 MiB if the info query is unavailable.
    """
    try:
        cap = pltpu.get_tpu_info().vmem_capacity_bytes
    except Exception:
        cap = 64 * _MiB
    return int(min(64 * _MiB, (cap * 3) // 4))


def _pick_row_tile(rows, row_bytes, sublane):
    """Row tile for the flattened (rows, hw) view.

    * ~8 MiB per buffer: double-buffered in + out = 32 MiB (+ tiny weight
      column), which fits every generation's budget while making the fixed
      ~0.35 us per-grid-step overhead <5% even at v7x's 3.2 TB/s HBM.
    * never collapse to a single grid step when >=2 sublane-aligned tiles are
      possible, so dimension_semantics=("parallel",) can shard the row axis
      across both TensorCores on v7x (harmless one extra step on v5e/v6e).
    """
    target_bytes = 8 * _MiB
    max_rows = max(1, target_bytes // max(1, row_bytes))
    if max_rows >= rows:
        if rows >= 2 * sublane:
            return _round_up(pl.cdiv(rows, 2), sublane)  # >= 2 aligned tiles
        return rows  # tiny input: one step; block == full array (always valid)
    return max(sublane, (max_rows // sublane) * sublane)


def rescale(x, weight):
    """Pallas TPU forward of Rescale: x (N,C,H,W) * weight (C,1,1)."""
    N, C, H, W = x.shape
    rows, hw = N * C, H * W
    itemsize = jnp.dtype(x.dtype).itemsize
    sublane = {4: 8, 2: 16, 1: 32}.get(itemsize, 8)

    # Lane-dense flattened view (contiguous reshape -> free).  Lane-density
    # guard: pad the last dim up to a multiple of 128 so stores are full-width
    # unmasked vst instead of masked vst.msk on arbitrary H*W.
    x2 = x.reshape(rows, hw)
    pad = (-hw) % _LANES
    if pad:
        x2 = jnp.pad(x2, ((0, 0), (0, pad)))
    hw_p = hw + pad

    r_tile = _pick_row_tile(rows, hw_p * itemsize, sublane)
    num_tiles = pl.cdiv(rows, r_tile)
    rows_pad = num_tiles * r_tile

    # Per-row weight column: flattened row n*C + c is scaled by weight[c].
    # Multiply directly in x.dtype (native bf16 VALU on v6e/v7x; Mosaic
    # upcasts internally on v5e).  Note: output dtype is x.dtype — if the
    # activations are lower precision than the f32 parameter this matches
    # "autocast"-style behavior rather than strict PyTorch f32 promotion.
    # Padded to rows_pad so the in-kernel slice of the resident column never
    # goes out of bounds on a ragged last tile.
    w_col = jnp.tile(weight.reshape(C).astype(x.dtype), N)
    if rows_pad != rows:
        w_col = jnp.pad(w_col, (0, rows_pad - rows))
    w_col = w_col.reshape(rows_pad, 1)

    aligned = (r_tile % sublane) == 0

    def kernel(w_ref, x_ref, o_ref):
        # w_ref is the full, VMEM-resident weight column (same block index
        # every step -> DMA'd once); slice out this tile's rows.
        i = pl.program_id(0)
        start = i * r_tile
        if aligned:
            start = pl.multiple_of(start, sublane)
        w = w_ref[pl.ds(start, r_tile), :]
        o_ref[...] = (x_ref[...] * w).astype(o_ref.dtype)

    cost = pl.CostEstimate(
        flops=rows * hw_p,
        transcendentals=0,
        bytes_accessed=2 * rows * hw_p * itemsize + rows_pad * itemsize,
    )

    out2 = pl.pallas_call(
        kernel,
        out_shape=jax.ShapeDtypeStruct((rows, hw_p), x.dtype),
        grid_spec=pltpu.PrefetchScalarGridSpec(
            num_scalar_prefetch=0,
            grid=(num_tiles,),
            in_specs=[
                pl.BlockSpec((rows_pad, 1), lambda i: (0, 0)),   # resident weight
                pl.BlockSpec((r_tile, hw_p), lambda i: (i, 0)),  # x row tile
            ],
            out_specs=pl.BlockSpec((r_tile, hw_p), lambda i: (i, 0)),
        ),
        compiler_params=pltpu.CompilerParams(
            # Row axis is fully independent -> megacore sharding on v7x.
            dimension_semantics=("parallel",),
            vmem_limit_bytes=_vmem_budget_bytes(),
        ),
        cost_estimate=cost,
    )(w_col, x2)

    out = out2[:, :hw] if pad else out2
    return out.reshape(N, C, H, W)


if __name__ == "__main__":
    key = jax.random.PRNGKey(0)
    N, C, H, W = 2, 4, 16, 16

    x = jax.random.normal(key, (N, C, H, W), dtype=jnp.float32)
    # nn.Parameter(torch.ones(num_channels, 1, 1)) -> deterministic init of ones.
    weight = jnp.ones((C, 1, 1), dtype=jnp.float32)

    out = rescale(x, weight)
    jax.block_until_ready(out)

    # Reference check (pure JAX broadcast, same as PyTorch semantics).
    ref = x * weight.reshape(1, C, 1, 1)
    assert out.shape == x.shape
    assert jnp.allclose(out, ref, atol=1e-6), "mismatch vs reference"

    print("KERNEL_OK")
</pallas_src>

<mosaic_0001>
module attributes {stable_mosaic.version = 11 : i64} {
  func.func @kernel(%arg0: i32, %arg1: memref<8x1xf32, #tpu.memory_space<vmem>>, %arg2: memref<8x256xf32, #tpu.memory_space<vmem>>, %arg3: memref<8x256xf32, #tpu.memory_space<vmem>>) attributes {dimension_semantics = [#tpu.dimension_semantics<parallel>], iteration_bounds = array<i64: 1>, scalar_prefetch = 0 : i64, scratch_operands = 0 : i64, tpu.core_type = #tpu.core_type<tc>, window_params = [{pipeline_mode = #tpu.pipeline_mode<synchronous>, transform_indices = @transform_0, window_bounds = array<i64: 8, 1>}, {transform_indices = @transform_1, window_bounds = array<i64: 8, 256>}, {transform_indices = @transform_2, window_bounds = array<i64: 8, 256>}]} {
    %c8_i32 = arith.constant 8 : i32
    %0 = arith.muli %arg0, %c8_i32 : i32
    %1 = tpu.assume_multiple %0, 8 : i32
    %2 = arith.index_cast %1 : i32 to index
    %c0 = arith.constant 0 : index
    %3 = vector.load %arg1[%2, %c0] : memref<8x1xf32, #tpu.memory_space<vmem>>, vector<8x1xf32>
    %c0_0 = arith.constant 0 : index
    %c0_1 = arith.constant 0 : index
    %4 = vector.load %arg2[%c0_0, %c0_1] : memref<8x256xf32, #tpu.memory_space<vmem>>, vector<8x256xf32>
    %5 = vector.broadcast %3 : vector<8x1xf32> to vector<8x256xf32>
    %6 = arith.mulf %4, %5 : vector<8x256xf32>
    %c0_2 = arith.constant 0 : index
    %c0_3 = arith.constant 0 : index
    %7 = vector.load %arg3[%c0_2, %c0_3] : memref<8x256xf32, #tpu.memory_space<vmem>>, vector<8x256xf32>
    tpu.vector_store %arg3[%c0_2, %c0_3], %6 {strides = array<i32>} : memref<8x256xf32, #tpu.memory_space<vmem>>, vector<8x256xf32>,
    return
  }
  func.func @transform_0(%arg0: i32) -> (i32, i32) {
    %c0_i32 = arith.constant 0 : i32
    %c0_i32_0 = arith.constant 0 : i32
    %c0_i32_1 = arith.constant 0 : i32
    return %c0_i32, %c0_i32_0 : i32, i32
  }
  func.func @transform_1(%arg0: i32) -> (i32, i32) {
    %c0_i32 = arith.constant 0 : i32
    %c0_i32_0 = arith.constant 0 : i32
    return %arg0, %c0_i32 : i32, i32
  }
  func.func @transform_2(%arg0: i32) -> (i32, i32) {
    %c0_i32 = arith.constant 0 : i32
    %c0_i32_0 = arith.constant 0 : i32
    return %arg0, %c0_i32 : i32, i32
  }
}

</mosaic_0001>

<llo_original>
// kernel: tpu_custom_call.1
$region0: #{tpu_custom_call.1}
  #allocation0 [shape = 'u32[]', space=smem, size = 0x4, offset = 0x4, fixed_abs, tag = 'smem constant byte address 0x4 - core index']
  #allocation1 [shape = 'u32[144,128]{1,0:T(1,128)}', space=vmem, size = 0x12000, scoped, tag = 'internal scratch']
  %s0 = inlined_call_operand.vmem [shape: f32[8,1], index: 0, kind: input, shape index: {}]
  %s1 = inlined_call_operand.hbm [shape: f32[8,256], index: 1, kind: input, shape index: {}]
  %s2 = inlined_call_operand.hbm [shape: f32[8,256], index: 2, kind: output, shape index: {}]
  %s3 = sld [smem:[#allocation0]]
  $region22: #{tpu_custom_call.1} parent=0
    _
  %s5 = ssub.s32 1, %s3
  %s6 = scalar_select 0, %s5, %s3
  $region1: #{tpu_custom_call.1} parent=0
    #allocation2 [shape = 'u8[8192]{0}', space=vmem, size = 0x2000, scoped, tag = 'input window, operand 1, single buffered']
    #allocation3 [shape = 's32[1]{0}', space=sflag, size = 0x4, scoped, tag = 'scoped memory for tpu_custom_call.1']
    #allocation4 [shape = 's32[1]{0}', space=sflag, size = 0x4, scoped, tag = 'scoped memory for tpu_custom_call.1']
    #allocation5 [shape = 'u8[8192]{0}', space=vmem, size = 0x2000, scoped, tag = 'output window, operand 0, single buffered']
    %7 = vsyncpa [#allocation3], 0
    %8 = vsyncpa [#allocation4], 0
    // Predicated region
    $region2: #{tpu_custom_call.1} parent=1 // pred_check
      _
    $region3: #{tpu_custom_call.1} parent=1 // pred_check_branch
      %10 = sbr.rel (0) target = $region5
    $region4: #{tpu_custom_call.1} parent=1 // pred_region
      _
    $region5: #{tpu_custom_call.1} parent=1 // pred_fallthru
      _
    // Predicated region
    $region6: #{tpu_custom_call.1} parent=1 // pred_check
      _
    $region7: #{tpu_custom_call.1} parent=1 // pred_check_branch
      %12 = sbr.rel (0) target = $region9
    $region8: #{tpu_custom_call.1} parent=1 // pred_region
      %s14 = ssub.s32 256, 256
      %15 = vsyncadd [#allocation3], %s14
      %s17 = sshll.u32 [#allocation2], 4
      %s18 = int_to_ptr.vmem [resolvable:$true] %s17
      %20 = dma.hbm_to_vmem [thread:$0]  %s1, 256, %s18, [#allocation3]
    $region9: #{tpu_custom_call.1} parent=1 // pred_fallthru
      _
    // Predicated region
    $region10: #{tpu_custom_call.1} parent=1 // pred_check
      _
    $region11: #{tpu_custom_call.1} parent=1 // pred_check_branch
      %22 = sbr.rel (0) target = $region13
    $region12: #{tpu_custom_call.1} parent=1 // pred_region
      %23 = dma.done [#allocation3], 256
    $region13: #{tpu_custom_call.1} parent=1 // pred_fallthru
      _
    %s24 = smul.u32 0, 8
    %s25 = scalar_lea.vmem %s0, %s24
    %v26 = vld [vmem:[%s25] sm:$0xff]
    %v27 = vld [vmem:[#allocation2] sm:$0xff]
    %v28 = vld [vmem:[#allocation2 + $0x8] sm:$0xff]
    %30 = vset.pattern.permute.xlu0 0
    %31 = vperm.xlu0 %30, %v26
    %v32 = vpop.permute.xlu0 %31
    %v34 = vmul.f32 %v27, %v32
    %v35 = vmul.f32 %v28, %v32
    %36 = vst [vmem:[#allocation5] sm:$0xff] %v34
    %37 = vst [vmem:[#allocation5 + $0x8] sm:$0xff] %v35
    // Predicated region
    $region14: #{tpu_custom_call.1} parent=1 // pred_check
      _
    $region15: #{tpu_custom_call.1} parent=1 // pred_check_branch
      %39 = sbr.rel (0) target = $region17
    $region16: #{tpu_custom_call.1} parent=1 // pred_region
      %s41 = ssub.s32 256, 256
      %42 = vsyncadd [#allocation4], %s41
      %s44 = sshll.u32 [#allocation5], 4
      %s45 = int_to_ptr.vmem [resolvable:$true] %s44
      %47 = dma.vmem_to_hbm [thread:$0]  %s45, 256, %s2, [#allocation4]
    $region17: #{tpu_custom_call.1} parent=1 // pred_fallthru
      _
    // Predicated region
    $region18: #{tpu_custom_call.1} parent=1 // pred_check
      _
    $region19: #{tpu_custom_call.1} parent=1 // pred_check_branch
      %49 = sbr.rel (0) target = $region21
    $region20: #{tpu_custom_call.1} parent=1 // pred_region
      %50 = dma.done [#allocation4], 256
    $region21: #{tpu_custom_call.1} parent=1 // pred_fallthru
      _
    %51 = vsyncpa [#allocation3], 1
    %52 = vsyncpa [#allocation4], 1

</llo_original>
